<compile_context>
chip_gen: v5e
topology: v5e:2x2
jax: 0.10.0
libtpu: 0.0.40
codegen_flags: <defaults>
</compile_context>

<pallas_src>
import functools

import jax
import jax.numpy as jnp
from jax.experimental import pallas as pl
from jax.experimental.pallas import tpu as pltpu


def _round_up(n, m):
    return ((n + m - 1) // m) * m


def ffn_kernel(x_ref, w1_ref, b1_ref, w2_ref, b2_ref, o_ref, acc_ref):
    k = pl.program_id(1)

    @pl.when(k == 0)
    def _():
        acc_ref[...] = jnp.zeros_like(acc_ref)

    # (tm, d) @ (d, tk) -> (tm, tk) on the MXU, f32 accumulation.
    h = jnp.dot(x_ref[...], w1_ref[...], preferred_element_type=jnp.float32)
    h = jnp.maximum(h + b1_ref[...], 0.0)          # bias + ReLU in f32 on the VPU
    # (tm, tk) @ (tk, d) -> (tm, d), accumulated across hidden-dim chunks.
    acc_ref[...] += jnp.dot(h.astype(w2_ref.dtype), w2_ref[...],
                            preferred_element_type=jnp.float32)

    @pl.when(k == pl.num_programs(1) - 1)
    def _():
        o_ref[...] = (acc_ref[...] + b2_ref[...]).astype(o_ref.dtype)


@functools.partial(jax.jit, static_argnames=("tm", "tk", "compute_dtype"))
def feed_forward_network(x, w1, b1, w2, b2, *, tm=256, tk=512, compute_dtype=None):
    """x: (B, T, d_model) -> (B, T, d_model). Matches Linear->ReLU->Linear (eval-mode dropout)."""
    B, T, d = x.shape
    d_hidden = w1.shape[1]
    out_dtype = x.dtype

    cdt = jnp.dtype(compute_dtype) if compute_dtype is not None else x.dtype
    xc = x.astype(cdt)
    w1c = w1.astype(cdt)
    w2c = w2.astype(cdt)
    b1f = jnp.asarray(b1, jnp.float32).reshape(1, d_hidden)
    b2f = jnp.asarray(b2, jnp.float32).reshape(1, d)

    rows = B * T
    x2 = xc.reshape(rows, d)

    # Lane-dense padding: feature dims to multiples of 128, rows to the row tile.
    dpad = _round_up(d, 128)
    hpad = _round_up(d_hidden, 128)
    tm_eff = min(tm, _round_up(rows, 128))
    tk_eff = min(tk, hpad)
    hpad = _round_up(hpad, tk_eff)
    rows_pad = _round_up(rows, tm_eff)

    x2p = jnp.pad(x2, ((0, rows_pad - rows), (0, dpad - d)))
    w1p = jnp.pad(w1c, ((0, dpad - d), (0, hpad - d_hidden)))
    b1p = jnp.pad(b1f, ((0, 0), (0, hpad - d_hidden)))
    w2p = jnp.pad(w2c, ((0, hpad - d_hidden), (0, dpad - d)))
    b2p = jnp.pad(b2f, ((0, 0), (0, dpad - d)))

    # VMEM budget: double-buffered x/out tiles + double-buffered weight chunks
    # + biases + f32 accumulator scratch, with headroom; clamped to stay safe on v7x.
    isz = jnp.dtype(cdt).itemsize
    vmem_bytes = (
        2 * (2 * tm_eff * dpad * isz)
        + 2 * (dpad * tk_eff + tk_eff * dpad) * isz
        + 2 * (tk_eff + dpad) * 4
        + tm_eff * dpad * 4
    )
    vmem_bytes = min(max(int(vmem_bytes * 1.5) + (2 << 20), 4 << 20), 64 << 20)

    grid = (rows_pad // tm_eff, hpad // tk_eff)

    out2 = pl.pallas_call(
        ffn_kernel,
        out_shape=jax.ShapeDtypeStruct((rows_pad, dpad), out_dtype),
        grid_spec=pltpu.PrefetchScalarGridSpec(
            num_scalar_prefetch=0,
            grid=grid,
            in_specs=[
                pl.BlockSpec((tm_eff, dpad), lambda i, k: (i, 0)),   # x row tile (reused over k)
                pl.BlockSpec((dpad, tk_eff), lambda i, k: (0, k)),   # W1 hidden chunk
                pl.BlockSpec((1, tk_eff), lambda i, k: (0, k)),      # b1 hidden chunk
                pl.BlockSpec((tk_eff, dpad), lambda i, k: (k, 0)),   # W2 hidden chunk
                pl.BlockSpec((1, dpad), lambda i, k: (0, 0)),        # b2
            ],
            out_specs=pl.BlockSpec((tm_eff, dpad), lambda i, k: (i, 0)),
            scratch_shapes=[pltpu.VMEM((tm_eff, dpad), jnp.float32)],
        ),
        compiler_params=pltpu.CompilerParams(
            dimension_semantics=("parallel", "arbitrary"),
            vmem_limit_bytes=vmem_bytes,
        ),
    )(x2p, w1p, b1p, w2p, b2p)

    return out2[:rows, :d].reshape(B, T, d)


def init_params(key, d_model):
    """Deterministic init mirroring PyTorch nn.Linear defaults: U(-1/sqrt(fan_in), 1/sqrt(fan_in))."""
    d_hidden = 4 * d_model
    k1, k2, k3, k4 = jax.random.split(key, 4)
    bound1 = 1.0 / jnp.sqrt(d_model)
    bound2 = 1.0 / jnp.sqrt(d_hidden)
    w1 = jax.random.uniform(k1, (d_model, d_hidden), jnp.float32, -bound1, bound1)
    b1 = jax.random.uniform(k2, (1, d_hidden), jnp.float32, -bound1, bound1)
    w2 = jax.random.uniform(k3, (d_hidden, d_model), jnp.float32, -bound2, bound2)
    b2 = jax.random.uniform(k4, (1, d_model), jnp.float32, -bound2, bound2)
    return w1, b1, w2, b2


if __name__ == "__main__":
    key = jax.random.PRNGKey(0)
    B, T, d_model = 2, 8, 32
    dropout = 0.1  # unused at eval time

    kx, kp = jax.random.split(key)
    x = jax.random.normal(kx, (B, T, d_model), jnp.float32)
    w1, b1, w2, b2 = init_params(kp, d_model)

    # f32 path: exact check vs plain-JAX reference.
    out = feed_forward_network(x, w1, b1, w2, b2)
    out = jax.block_until_ready(out)
    ref = jnp.maximum(x @ w1 + b1[0], 0.0) @ w2 + b2[0]
    assert out.shape == (B, T, d_model)
    assert jnp.allclose(out, ref, atol=1e-5, rtol=1e-5), "mismatch vs reference (f32)"

    # bf16 compute path (v6e/v7x fast path): compile/run + sanity check.
    out_bf16 = feed_forward_network(x, w1, b1, w2, b2, compute_dtype=jnp.bfloat16)
    out_bf16 = jax.block_until_ready(out_bf16)
    assert out_bf16.shape == (B, T, d_model)
    assert bool(jnp.all(jnp.isfinite(out_bf16)))

    print("KERNEL_OK")
</pallas_src>

<mosaic_0001>
module attributes {stable_mosaic.version = 11 : i64} {
  func.func @ffn_kernel(%arg0: i32, %arg1: i32, %arg2: memref<128x128xf32, #tpu.memory_space<vmem>>, %arg3: memref<128x128xf32, #tpu.memory_space<vmem>>, %arg4: memref<1x128xf32, #tpu.memory_space<vmem>>, %arg5: memref<128x128xf32, #tpu.memory_space<vmem>>, %arg6: memref<1x128xf32, #tpu.memory_space<vmem>>, %arg7: memref<128x128xf32, #tpu.memory_space<vmem>>, %arg8: memref<128x128xf32, #tpu.memory_space<vmem>>) attributes {dimension_semantics = [#tpu.dimension_semantics<parallel>, #tpu.dimension_semantics<arbitrary>], iteration_bounds = array<i64: 1, 1>, scalar_prefetch = 0 : i64, scratch_operands = 1 : i64, tpu.core_type = #tpu.core_type<tc>, window_params = [{transform_indices = @transform_0, window_bounds = array<i64: 128, 128>}, {transform_indices = @transform_1, window_bounds = array<i64: 128, 128>}, {transform_indices = @transform_2, window_bounds = array<i64: 1, 128>}, {transform_indices = @transform_3, window_bounds = array<i64: 128, 128>}, {pipeline_mode = #tpu.pipeline_mode<synchronous>, transform_indices = @transform_4, window_bounds = array<i64: 1, 128>}, {transform_indices = @transform_5, window_bounds = array<i64: 128, 128>}]} {
    %c0_i32 = arith.constant 0 : i32
    %0 = arith.cmpi eq, %arg1, %c0_i32 : i32
    %1 = arith.extui %0 : i1 to i32
    %c0_i32_0 = arith.constant 0 : i32
    %2 = arith.cmpi ne, %1, %c0_i32_0 : i32
    scf.if %2 {
      %cst_16 = arith.constant 0.000000e+00 : f32
      %19 = vector.broadcast %cst_16 : f32 to vector<128x128xf32>
      %c0_17 = arith.constant 0 : index
      %c0_18 = arith.constant 0 : index
      %20 = vector.load %arg8[%c0_17, %c0_18] : memref<128x128xf32, #tpu.memory_space<vmem>>, vector<128x128xf32>
      tpu.vector_store %arg8[%c0_17, %c0_18], %19 {strides = array<i32>} : memref<128x128xf32, #tpu.memory_space<vmem>>, vector<128x128xf32>,
    } else {
    }
    %c0 = arith.constant 0 : index
    %c0_1 = arith.constant 0 : index
    %3 = vector.load %arg2[%c0, %c0_1] : memref<128x128xf32, #tpu.memory_space<vmem>>, vector<128x128xf32>
    %c0_2 = arith.constant 0 : index
    %c0_3 = arith.constant 0 : index
    %4 = vector.load %arg3[%c0_2, %c0_3] : memref<128x128xf32, #tpu.memory_space<vmem>>, vector<128x128xf32>
    %cst = arith.constant dense<0.000000e+00> : vector<128x128xf32>
    %5 = tpu.matmul %3, %4, %cst {dimension_numbers = #tpu.dot_dimension_numbers<[1], [0], [0], [1], [0, 0, 1, 1], [], []>} : vector<128x128xf32>, vector<128x128xf32>, vector<128x128xf32> -> vector<128x128xf32>
    %c0_4 = arith.constant 0 : index
    %c0_5 = arith.constant 0 : index
    %6 = vector.load %arg4[%c0_4, %c0_5] : memref<1x128xf32, #tpu.memory_space<vmem>>, vector<1x128xf32>
    %7 = vector.broadcast %6 : vector<1x128xf32> to vector<128x128xf32>
    %8 = arith.addf %5, %7 : vector<128x128xf32>
    %cst_6 = arith.constant 0.000000e+00 : f32
    %9 = vector.broadcast %cst_6 : f32 to vector<128x128xf32>
    %10 = arith.maximumf %8, %9 : vector<128x128xf32>
    %c0_7 = arith.constant 0 : index
    %c0_8 = arith.constant 0 : index
    %11 = vector.load %arg8[%c0_7, %c0_8] : memref<128x128xf32, #tpu.memory_space<vmem>>, vector<128x128xf32>
    %c0_9 = arith.constant 0 : index
    %c0_10 = arith.constant 0 : index
    %12 = vector.load %arg5[%c0_9, %c0_10] : memref<128x128xf32, #tpu.memory_space<vmem>>, vector<128x128xf32>
    %cst_11 = arith.constant dense<0.000000e+00> : vector<128x128xf32>
    %13 = tpu.matmul %10, %12, %cst_11 {dimension_numbers = #tpu.dot_dimension_numbers<[1], [0], [0], [1], [0, 0, 1, 1], [], []>} : vector<128x128xf32>, vector<128x128xf32>, vector<128x128xf32> -> vector<128x128xf32>
    %14 = arith.addf %11, %13 : vector<128x128xf32>
    %c0_12 = arith.constant 0 : index
    %c0_13 = arith.constant 0 : index
    %15 = vector.load %arg8[%c0_12, %c0_13] : memref<128x128xf32, #tpu.memory_space<vmem>>, vector<128x128xf32>
    tpu.vector_store %arg8[%c0_12, %c0_13], %14 {strides = array<i32>} : memref<128x128xf32, #tpu.memory_space<vmem>>, vector<128x128xf32>,
    %c0_i32_14 = arith.constant 0 : i32
    %16 = arith.cmpi eq, %arg1, %c0_i32_14 : i32
    %17 = arith.extui %16 : i1 to i32
    %c0_i32_15 = arith.constant 0 : i32
    %18 = arith.cmpi ne, %17, %c0_i32_15 : i32
    scf.if %18 {
      %c0_16 = arith.constant 0 : index
      %c0_17 = arith.constant 0 : index
      %19 = vector.load %arg8[%c0_16, %c0_17] : memref<128x128xf32, #tpu.memory_space<vmem>>, vector<128x128xf32>
      %c0_18 = arith.constant 0 : index
      %c0_19 = arith.constant 0 : index
      %20 = vector.load %arg6[%c0_18, %c0_19] : memref<1x128xf32, #tpu.memory_space<vmem>>, vector<1x128xf32>
      %21 = vector.broadcast %20 : vector<1x128xf32> to vector<128x128xf32>
      %22 = arith.addf %19, %21 : vector<128x128xf32>
      %c0_20 = arith.constant 0 : index
      %c0_21 = arith.constant 0 : index
      %23 = vector.load %arg7[%c0_20, %c0_21] : memref<128x128xf32, #tpu.memory_space<vmem>>, vector<128x128xf32>
      tpu.vector_store %arg7[%c0_20, %c0_21], %22 {strides = array<i32>} : memref<128x128xf32, #tpu.memory_space<vmem>>, vector<128x128xf32>,
    } else {
    }
    return
  }
  func.func @transform_0(%arg0: i32, %arg1: i32) -> (i32, i32) {
    %c0_i32 = arith.constant 0 : i32
    %c0_i32_0 = arith.constant 0 : i32
    return %arg0, %c0_i32 : i32, i32
  }
  func.func @transform_1(%arg0: i32, %arg1: i32) -> (i32, i32) {
    %c0_i32 = arith.constant 0 : i32
    %c0_i32_0 = arith.constant 0 : i32
    return %c0_i32, %arg1 : i32, i32
  }
  func.func @transform_2(%arg0: i32, %arg1: i32) -> (i32, i32) {
    %c0_i32 = arith.constant 0 : i32
    %c0_i32_0 = arith.constant 0 : i32
    return %c0_i32, %arg1 : i32, i32
  }
  func.func @transform_3(%arg0: i32, %arg1: i32) -> (i32, i32) {
    %c0_i32 = arith.constant 0 : i32
    %c0_i32_0 = arith.constant 0 : i32
    return %arg1, %c0_i32 : i32, i32
  }
  func.func @transform_4(%arg0: i32, %arg1: i32) -> (i32, i32) {
    %c0_i32 = arith.constant 0 : i32
    %c0_i32_0 = arith.constant 0 : i32
    %c0_i32_1 = arith.constant 0 : i32
    return %c0_i32, %c0_i32_0 : i32, i32
  }
  func.func @transform_5(%arg0: i32, %arg1: i32) -> (i32, i32) {
    %c0_i32 = arith.constant 0 : i32
    %c0_i32_0 = arith.constant 0 : i32
    return %arg0, %c0_i32 : i32, i32
  }
}

</mosaic_0001>

<llo_original>
// kernel: feed_forward_network.1
$region0: #{feed_forward_network.1}
  #allocation0 [shape = 'u32[]', space=smem, size = 0x4, offset = 0x4, fixed_abs, tag = 'smem constant byte address 0x4 - core index']
  #allocation1 [shape = 'u32[72,128]{1,0:T(1,128)}', space=vmem, size = 0x9000, scoped, tag = 'internal scratch']
  #allocation2 [shape = 'f32[128,128]{1,0:T(8,128)}', space=vmem, size = 0x10000, scoped, tag = 'scratch operand']
  %s0 = inlined_call_operand.vmem [shape: f32[128,128], index: 0, kind: input, shape index: {}]
  %s1 = inlined_call_operand.vmem [shape: f32[128,128], index: 1, kind: input, shape index: {}]
  %s2 = inlined_call_operand.vmem [shape: f32[1,128], index: 2, kind: input, shape index: {}]
  %s3 = inlined_call_operand.vmem [shape: f32[128,128], index: 3, kind: input, shape index: {}]
  %s4 = inlined_call_operand.vmem [shape: f32[1,128], index: 4, kind: input, shape index: {}]
  %s5 = inlined_call_operand.vmem [shape: f32[128,128], index: 5, kind: output, shape index: {}]
  %s6 = sld [smem:[#allocation0]]
  $region38: #{feed_forward_network.1} parent=0
    _
  %s8 = ssub.s32 1, %s6
  %s9 = scalar_select 0, %s8, %s6
  // Predicated region
  $region2: #{feed_forward_network.1} parent=0 // pred_check
    _
  $region3: #{feed_forward_network.1} parent=0 // pred_check_branch
    %11 = sbr.rel (0) target = $region5
  $region4: #{feed_forward_network.1} parent=0 // pred_region
    _
  $region5: #{feed_forward_network.1} parent=0 // pred_fallthru
    _
  // Predicated region
  $region6: #{feed_forward_network.1} parent=0 // pred_check
    _
  $region7: #{feed_forward_network.1} parent=0 // pred_check_branch
    %13 = sbr.rel (0) target = $region9
  $region8: #{feed_forward_network.1} parent=0 // pred_region
    _
  $region9: #{feed_forward_network.1} parent=0 // pred_fallthru
    _
  // Predicated region
  $region10: #{feed_forward_network.1} parent=0 // pred_check
    _
  $region11: #{feed_forward_network.1} parent=0 // pred_check_branch
    %15 = sbr.rel (0) target = $region13
  $region12: #{feed_forward_network.1} parent=0 // pred_region
    _
  $region13: #{feed_forward_network.1} parent=0 // pred_fallthru
    _
  // Predicated region
  $region14: #{feed_forward_network.1} parent=0 // pred_check
    _
  $region15: #{feed_forward_network.1} parent=0 // pred_check_branch
    %17 = sbr.rel (0) target = $region17
  $region16: #{feed_forward_network.1} parent=0 // pred_region
    _
  $region17: #{feed_forward_network.1} parent=0 // pred_fallthru
    _
  // Predicated region
  $region18: #{feed_forward_network.1} parent=0 // pred_check
    _
  $region19: #{feed_forward_network.1} parent=0 // pred_check_branch
    %19 = sbr.rel (0) target = $region21
  $region20: #{feed_forward_network.1} parent=0 // pred_region
    _
  $region21: #{feed_forward_network.1} parent=0 // pred_fallthru
    _
  %p20 = scmp.eq.s32.totalorder 0, 0
  // Predicated region
  $region22: #{feed_forward_network.1} parent=0 // pred_check
    %p21 = pneg %p20
  $region23: #{feed_forward_network.1} parent=0 // pred_check_branch
    %23 = sbr.rel (%p21) target = $region25
  $region24: #{feed_forward_network.1} parent=0 // pred_region
    %24 = vst [vmem:[#allocation2] sm:$0xff] 0.0
    %25 = vst [vmem:[#allocation2 + $0x8] sm:$0xff] 0.0
    %26 = vst [vmem:[#allocation2 + $0x10] sm:$0xff] 0.0
    %27 = vst [vmem:[#allocation2 + $0x18] sm:$0xff] 0.0
    %28 = vst [vmem:[#allocation2 + $0x20] sm:$0xff] 0.0
    %29 = vst [vmem:[#allocation2 + $0x28] sm:$0xff] 0.0
    %30 = vst [vmem:[#allocation2 + $0x30] sm:$0xff] 0.0
    %31 = vst [vmem:[#allocation2 + $0x38] sm:$0xff] 0.0
    %32 = vst [vmem:[#allocation2 + $0x40] sm:$0xff] 0.0
    %33 = vst [vmem:[#allocation2 + $0x48] sm:$0xff] 0.0
    %34 = vst [vmem:[#allocation2 + $0x50] sm:$0xff] 0.0
    %35 = vst [vmem:[#allocation2 + $0x58] sm:$0xff] 0.0
    %36 = vst [vmem:[#allocation2 + $0x60] sm:$0xff] 0.0
    %37 = vst [vmem:[#allocation2 + $0x68] sm:$0xff] 0.0
    %38 = vst [vmem:[#allocation2 + $0x70] sm:$0xff] 0.0
    %39 = vst [vmem:[#allocation2 + $0x78] sm:$0xff] 0.0
  $region25: #{feed_forward_network.1} parent=0 // pred_fallthru
    _
  %v40 = vld [vmem:[%s0] sm:$0xff]
  %v41 = vld [vmem:[%s0 + $0x8] sm:$0xff]
  %v42 = vld [vmem:[%s0 + $0x10] sm:$0xff]
  %v43 = vld [vmem:[%s0 + $0x18] sm:$0xff]
  %v44 = vld [vmem:[%s0 + $0x20] sm:$0xff]
  %v45 = vld [vmem:[%s0 + $0x28] sm:$0xff]
  %v46 = vld [vmem:[%s0 + $0x30] sm:$0xff]
  %v47 = vld [vmem:[%s0 + $0x38] sm:$0xff]
  %v48 = vld [vmem:[%s0 + $0x40] sm:$0xff]
  %v49 = vld [vmem:[%s0 + $0x48] sm:$0xff]
  %v50 = vld [vmem:[%s0 + $0x50] sm:$0xff]
  %v51 = vld [vmem:[%s0 + $0x58] sm:$0xff]
  %v52 = vld [vmem:[%s0 + $0x60] sm:$0xff]
  %v53 = vld [vmem:[%s0 + $0x68] sm:$0xff]
  %v54 = vld [vmem:[%s0 + $0x70] sm:$0xff]
  %v55 = vld [vmem:[%s0 + $0x78] sm:$0xff]
  %v56 = vld [vmem:[%s1] sm:$0xff]
  %v57 = vld [vmem:[%s1 + $0x8] sm:$0xff]
  %v58 = vld [vmem:[%s1 + $0x10] sm:$0xff]
  %v59 = vld [vmem:[%s1 + $0x18] sm:$0xff]
  %v60 = vld [vmem:[%s1 + $0x20] sm:$0xff]
  %v61 = vld [vmem:[%s1 + $0x28] sm:$0xff]
  %v62 = vld [vmem:[%s1 + $0x30] sm:$0xff]
  %v63 = vld [vmem:[%s1 + $0x38] sm:$0xff]
  %v64 = vld [vmem:[%s1 + $0x40] sm:$0xff]
  %v65 = vld [vmem:[%s1 + $0x48] sm:$0xff]
  %v66 = vld [vmem:[%s1 + $0x50] sm:$0xff]
  %v67 = vld [vmem:[%s1 + $0x58] sm:$0xff]
  %v68 = vld [vmem:[%s1 + $0x60] sm:$0xff]
  %v69 = vld [vmem:[%s1 + $0x68] sm:$0xff]
  %v70 = vld [vmem:[%s1 + $0x70] sm:$0xff]
  %v71 = vld [vmem:[%s1 + $0x78] sm:$0xff]
  %v72 = vld [vmem:[%s2] sm:$0x1]
  %v74 = vperm.slane %v72, 0
  %76 = vmatpush.msra.mxu0 %v71
  %77 = vmatpush.msra.mxu0 %v70
  %78 = vmatpush.msra.mxu0 %v69
  %79 = vmatpush.msra.mxu0 %v68
  %80 = vmatpush.msra.mxu0 %v67
  %81 = vmatpush.msra.mxu0 %v66
  %82 = vmatpush.msra.mxu0 %v65
  %83 = vmatpush.msra.mxu0 %v64
  %84 = vmatpush.msra.mxu0 %v63
  %85 = vmatpush.msra.mxu0 %v62
  %86 = vmatpush.msra.mxu0 %v61
  %87 = vmatpush.msra.mxu0 %v60
  %88 = vmatpush.msra.mxu0 %v59
  %89 = vmatpush.msra.mxu0 %v58
  %90 = vmatpush.msra.mxu0 %v57
  %91 = vmatpush.msra.mxu0 %v56
  %92 = vmatmul.f32.gmra.mxu0 %v40
  %v93 = vpop.f32.mrf.mxu0
  %v94 = vadd.f32 %v74, %v93
  %95 = vmatmul.f32.gmra.mxu0 %v41
  %v96 = vpop.f32.mrf.mxu0
  %v97 = vadd.f32 %v74, %v96
  %98 = vmatmul.f32.gmra.mxu0 %v42
  %v99 = vpop.f32.mrf.mxu0
  %v100 = vadd.f32 %v74, %v99
  %101 = vmatmul.f32.gmra.mxu0 %v43
  %v102 = vpop.f32.mrf.mxu0
  %v103 = vadd.f32 %v74, %v102
  %104 = vmatmul.f32.gmra.mxu0 %v44
  %v105 = vpop.f32.mrf.mxu0
  %v106 = vadd.f32 %v74, %v105
  %107 = vmatmul.f32.gmra.mxu0 %v45
  %v108 = vpop.f32.mrf.mxu0
  %v109 = vadd.f32 %v74, %v108
  %110 = vmatmul.f32.gmra.mxu0 %v46
  %v111 = vpop.f32.mrf.mxu0
  %v112 = vadd.f32 %v74, %v111
  %113 = vmatmul.f32.gmra.mxu0 %v47
  %v114 = vpop.f32.mrf.mxu0
  %v115 = vadd.f32 %v74, %v114
  %116 = vmatmul.f32.gmra.mxu0 %v48
  %v117 = vpop.f32.mrf.mxu0
  %v118 = vadd.f32 %v74, %v117
  %119 = vmatmul.f32.gmra.mxu0 %v49
  %v120 = vpop.f32.mrf.mxu0
  %v121 = vadd.f32 %v74, %v120
  %122 = vmatmul.f32.gmra.mxu0 %v50
  %v123 = vpop.f32.mrf.mxu0
  %v124 = vadd.f32 %v74, %v123
  %125 = vmatmul.f32.gmra.mxu0 %v51
  %v126 = vpop.f32.mrf.mxu0
  %v127 = vadd.f32 %v74, %v126
  %128 = vmatmul.f32.gmra.mxu0 %v52
  %v129 = vpop.f32.mrf.mxu0
  %v130 = vadd.f32 %v74, %v129
  %131 = vmatmul.f32.gmra.mxu0 %v53
  %v132 = vpop.f32.mrf.mxu0
  %v133 = vadd.f32 %v74, %v132
  %134 = vmatmul.f32.gmra.mxu0 %v54
  %v135 = vpop.f32.mrf.mxu0
  %v136 = vadd.f32 %v74, %v135
  %137 = vmatmul.f32.gmra.mxu0 %v55
  %v138 = vpop.f32.mrf.mxu0
  %v139 = vadd.f32 %v74, %v138
  %140 = vdwg.mxu0
  %v141 = vmax.f32 %v94, 0.0
  %v142 = vmax.f32 %v97, 0.0
  %v143 = vmax.f32 %v100, 0.0
  %v144 = vmax.f32 %v103, 0.0
  %v145 = vmax.f32 %v106, 0.0
  %v146 = vmax.f32 %v109, 0.0
  %v147 = vmax.f32 %v112, 0.0
  %v148 = vmax.f32 %v115, 0.0
  %v149 = vmax.f32 %v118, 0.0
  %v150 = vmax.f32 %v121, 0.0
  %v151 = vmax.f32 %v124, 0.0
  %v152 = vmax.f32 %v127, 0.0
  %v153 = vmax.f32 %v130, 0.0
  %v154 = vmax.f32 %v133, 0.0
  %v155 = vmax.f32 %v136, 0.0
  %v156 = vmax.f32 %v139, 0.0
  %v157 = vld [vmem:[#allocation2] sm:$0xff]
  %v158 = vld [vmem:[#allocation2 + $0x8] sm:$0xff]
  %v159 = vld [vmem:[#allocation2 + $0x10] sm:$0xff]
  %v160 = vld [vmem:[#allocation2 + $0x18] sm:$0xff]
  %v161 = vld [vmem:[#allocation2 + $0x20] sm:$0xff]
  %v162 = vld [vmem:[#allocation2 + $0x28] sm:$0xff]
  %v163 = vld [vmem:[#allocation2 + $0x30] sm:$0xff]
  %v164 = vld [vmem:[#allocation2 + $0x38] sm:$0xff]
  %v165 = vld [vmem:[#allocation2 + $0x40] sm:$0xff]
  %v166 = vld [vmem:[#allocation2 + $0x48] sm:$0xff]
  %v167 = vld [vmem:[#allocation2 + $0x50] sm:$0xff]
  %v168 = vld [vmem:[#allocation2 + $0x58] sm:$0xff]
  %v169 = vld [vmem:[#allocation2 + $0x60] sm:$0xff]
  %v170 = vld [vmem:[#allocation2 + $0x68] sm:$0xff]
  %v171 = vld [vmem:[#allocation2 + $0x70] sm:$0xff]
  %v172 = vld [vmem:[#allocation2 + $0x78] sm:$0xff]
  %v173 = vld [vmem:[%s3] sm:$0xff]
  %v174 = vld [vmem:[%s3 + $0x8] sm:$0xff]
  %v175 = vld [vmem:[%s3 + $0x10] sm:$0xff]
  %v176 = vld [vmem:[%s3 + $0x18] sm:$0xff]
  %v177 = vld [vmem:[%s3 + $0x20] sm:$0xff]
  %v178 = vld [vmem:[%s3 + $0x28] sm:$0xff]
  %v179 = vld [vmem:[%s3 + $0x30] sm:$0xff]
  %v180 = vld [vmem:[%s3 + $0x38] sm:$0xff]
  %v181 = vld [vmem:[%s3 + $0x40] sm:$0xff]
  %v182 = vld [vmem:[%s3 + $0x48] sm:$0xff]
  %v183 = vld [vmem:[%s3 + $0x50] sm:$0xff]
  %v184 = vld [vmem:[%s3 + $0x58] sm:$0xff]
  %v185 = vld [vmem:[%s3 + $0x60] sm:$0xff]
  %v186 = vld [vmem:[%s3 + $0x68] sm:$0xff]
  %v187 = vld [vmem:[%s3 + $0x70] sm:$0xff]
  %v188 = vld [vmem:[%s3 + $0x78] sm:$0xff]
  %189 = vmatpush.msra.mxu0 %v188
  %190 = vmatpush.msra.mxu0 %v187
  %191 = vmatpush.msra.mxu0 %v186
  %192 = vmatpush.msra.mxu0 %v185
  %193 = vmatpush.msra.mxu0 %v184
  %194 = vmatpush.msra.mxu0 %v183
  %195 = vmatpush.msra.mxu0 %v182
  %196 = vmatpush.msra.mxu0 %v181
  %197 = vmatpush.msra.mxu0 %v180
  %198 = vmatpush.msra.mxu0 %v179
  %199 = vmatpush.msra.mxu0 %v178
  %200 = vmatpush.msra.mxu0 %v177
  %201 = vmatpush.msra.mxu0 %v176
  %202 = vmatpush.msra.mxu0 %v175
  %203 = vmatpush.msra.mxu0 %v174
  %204 = vmatpush.msra.mxu0 %v173
  %205 = vmatmul.f32.gmra.mxu0 %v141
  %v206 = vpop.f32.mrf.mxu0
  %v207 = vadd.f32 0.0, %v206
  %208 = vmatmul.f32.gmra.mxu0 %v142
  %v209 = vpop.f32.mrf.mxu0
  %v210 = vadd.f32 0.0, %v209
  %211 = vmatmul.f32.gmra.mxu0 %v143
  %v212 = vpop.f32.mrf.mxu0
  %v213 = vadd.f32 0.0, %v212
  %214 = vmatmul.f32.gmra.mxu0 %v144
  %v215 = vpop.f32.mrf.mxu0
  %v216 = vadd.f32 0.0, %v215
  %217 = vmatmul.f32.gmra.mxu0 %v145
  %v218 = vpop.f32.mrf.mxu0
  %v219 = vadd.f32 0.0, %v218
  %220 = vmatmul.f32.gmra.mxu0 %v146
  %v221 = vpop.f32.mrf.mxu0
  %v222 = vadd.f32 0.0, %v221
  %223 = vmatmul.f32.gmra.mxu0 %v147
  %v224 = vpop.f32.mrf.mxu0
  %v225 = vadd.f32 0.0, %v224
  %226 = vmatmul.f32.gmra.mxu0 %v148
  %v227 = vpop.f32.mrf.mxu0
  %v228 = vadd.f32 0.0, %v227
  %229 = vmatmul.f32.gmra.mxu0 %v149
  %v230 = vpop.f32.mrf.mxu0
  %v231 = vadd.f32 0.0, %v230
  %232 = vmatmul.f32.gmra.mxu0 %v150
  %v233 = vpop.f32.mrf.mxu0
  %v234 = vadd.f32 0.0, %v233
  %235 = vmatmul.f32.gmra.mxu0 %v151
  %v236 = vpop.f32.mrf.mxu0
  %v237 = vadd.f32 0.0, %v236
  %238 = vmatmul.f32.gmra.mxu0 %v152
  %v239 = vpop.f32.mrf.mxu0
  %v240 = vadd.f32 0.0, %v239
  %241 = vmatmul.f32.gmra.mxu0 %v153
  %v242 = vpop.f32.mrf.mxu0
  %v243 = vadd.f32 0.0, %v242
  %244 = vmatmul.f32.gmra.mxu0 %v154
  %v245 = vpop.f32.mrf.mxu0
  %v246 = vadd.f32 0.0, %v245
  %247 = vmatmul.f32.gmra.mxu0 %v155
  %v248 = vpop.f32.mrf.mxu0
  %v249 = vadd.f32 0.0, %v248
  %250 = vmatmul.f32.gmra.mxu0 %v156
  %v251 = vpop.f32.mrf.mxu0
  %v252 = vadd.f32 0.0, %v251
  %253 = vdwg.mxu0
  %v254 = vadd.f32 %v157, %v207
  %v255 = vadd.f32 %v158, %v210
  %v256 = vadd.f32 %v159, %v213
  %v257 = vadd.f32 %v160, %v216
  %v258 = vadd.f32 %v161, %v219
  %v259 = vadd.f32 %v162, %v222
  %v260 = vadd.f32 %v163, %v225
  %v261 = vadd.f32 %v164, %v228
  %v262 = vadd.f32 %v165, %v231
  %v263 = vadd.f32 %v166, %v234
  %v264 = vadd.f32 %v167, %v237
  %v265 = vadd.f32 %v168, %v240
  %v266 = vadd.f32 %v169, %v243
  %v267 = vadd.f32 %v170, %v246
  %v268 = vadd.f32 %v171, %v249
  %v269 = vadd.f32 %v172, %v252
  %270 = vst [vmem:[#allocation2] sm:$0xff] %v254
  %271 = vst [vmem:[#allocation2 + $0x8] sm:$0xff] %v255
  %272 = vst [vmem:[#allocation2 + $0x10] sm:$0xff] %v256
  %273 = vst [vmem:[#allocation2 + $0x18] sm:$0xff] %v257
  %274 = vst [vmem:[#allocation2 + $0x20] sm:$0xff] %v258
  %275 = vst [vmem:[#allocation2 + $0x28] sm:$0xff] %v259
  %276 = vst [vmem:[#allocation2 + $0x30] sm:$0xff] %v260
  %277 = vst [vmem:[#allocation2 + $0x38] sm:$0xff] %v261
  %278 = vst [vmem:[#allocation2 + $0x40] sm:$0xff] %v262
  %279 = vst [vmem:[#allocation2 + $0x48] sm:$0xff] %v263
  %280 = vst [vmem:[#allocation2 + $0x50] sm:$0xff] %v264
  %281 = vst [vmem:[#allocation2 + $0x58] sm:$0xff] %v265
  %282 = vst [vmem:[#allocation2 + $0x60] sm:$0xff] %v266
  %283 = vst [vmem:[#allocation2 + $0x68] sm:$0xff] %v267
  %284 = vst [vmem:[#allocation2 + $0x70] sm:$0xff] %v268
  %285 = vst [vmem:[#allocation2 + $0x78] sm:$0xff] %v269
  // Predicated region
  $region26: #{feed_forward_network.1} parent=0 // pred_check
    %p286 = pneg %p20
  $region27: #{feed_forward_network.1} parent=0 // pred_check_branch
    %288 = sbr.rel (%p286) target = $region29
  $region28: #{feed_forward_network.1} parent=0 // pred_region
    %v289 = vld [vmem:[#allocation2] sm:$0xff]
    %v290 = vld [vmem:[#allocation2 + $0x8] sm:$0xff]
    %v291 = vld [vmem:[#allocation2 + $0x10] sm:$0xff]
    %v292 = vld [vmem:[#allocation2 + $0x18] sm:$0xff]
    %v293 = vld [vmem:[#allocation2 + $0x20] sm:$0xff]
    %v294 = vld [vmem:[#allocation2 + $0x28] sm:$0xff]
    %v295 = vld [vmem:[#allocation2 + $0x30] sm:$0xff]
    %v296 = vld [vmem:[#allocation2 + $0x38] sm:$0xff]
    %v297 = vld [vmem:[#allocation2 + $0x40] sm:$0xff]
    %v298 = vld [vmem:[#allocation2 + $0x48] sm:$0xff]
    %v299 = vld [vmem:[#allocation2 + $0x50] sm:$0xff]
    %v300 = vld [vmem:[#allocation2 + $0x58] sm:$0xff]
    %v301 = vld [vmem:[#allocation2 + $0x60] sm:$0xff]
    %v302 = vld [vmem:[#allocation2 + $0x68] sm:$0xff]
    %v303 = vld [vmem:[#allocation2 + $0x70] sm:$0xff]
    %v304 = vld [vmem:[#allocation2 + $0x78] sm:$0xff]
    %v305 = vld [vmem:[%s4] sm:$0x1]
    %v307 = vperm.slane %v305, 0
    %v309 = vadd.f32 %v289, %v307
    %v310 = vadd.f32 %v290, %v307
    %v311 = vadd.f32 %v291, %v307
    %v312 = vadd.f32 %v292, %v307
    %v313 = vadd.f32 %v293, %v307
    %v314 = vadd.f32 %v294, %v307
    %v315 = vadd.f32 %v295, %v307
    %v316 = vadd.f32 %v296, %v307
    %v317 = vadd.f32 %v297, %v307
    %v318 = vadd.f32 %v298, %v307
    %v319 = vadd.f32 %v299, %v307
    %v320 = vadd.f32 %v300, %v307
    %v321 = vadd.f32 %v301, %v307
    %v322 = vadd.f32 %v302, %v307
    %v323 = vadd.f32 %v303, %v307
    %v324 = vadd.f32 %v304, %v307
    %325 = vst [vmem:[%s5] sm:$0xff] %v309
    %326 = vst [vmem:[%s5 + $0x8] sm:$0xff] %v310
    %327 = vst [vmem:[%s5 + $0x10] sm:$0xff] %v311
    %328 = vst [vmem:[%s5 + $0x18] sm:$0xff] %v312
    %329 = vst [vmem:[%s5 + $0x20] sm:$0xff] %v313
    %330 = vst [vmem:[%s5 + $0x28] sm:$0xff] %v314
    %331 = vst [vmem:[%s5 + $0x30] sm:$0xff] %v315
    %332 = vst [vmem:[%s5 + $0x38] sm:$0xff] %v316
    %333 = vst [vmem:[%s5 + $0x40] sm:$0xff] %v317
    %334 = vst [vmem:[%s5 + $0x48] sm:$0xff] %v318
    %335 = vst [vmem:[%s5 + $0x50] sm:$0xff] %v319
    %336 = vst [vmem:[%s5 + $0x58] sm:$0xff] %v320
    %337 = vst [vmem:[%s5 + $0x60] sm:$0xff] %v321
    %338 = vst [vmem:[%s5 + $0x68] sm:$0xff] %v322
    %339 = vst [vmem:[%s5 + $0x70] sm:$0xff] %v323
    %340 = vst [vmem:[%s5 + $0x78] sm:$0xff] %v324
  $region29: #{feed_forward_network.1} parent=0 // pred_fallthru
    _
  // Predicated region
  $region30: #{feed_forward_network.1} parent=0 // pred_check
    _
  $region31: #{feed_forward_network.1} parent=0 // pred_check_branch
    %342 = sbr.rel (0) target = $region33
  $region32: #{feed_forward_network.1} parent=0 // pred_region
    _
  $region33: #{feed_forward_network.1} parent=0 // pred_fallthru
    _
  // Predicated region
  $region34: #{feed_forward_network.1} parent=0 // pred_check
    _
  $region35: #{feed_forward_network.1} parent=0 // pred_check_branch
    %344 = sbr.rel (0) target = $region37
  $region36: #{feed_forward_network.1} parent=0 // pred_region
    _
  $region37: #{feed_forward_network.1} parent=0 // pred_fallthru
    _

</llo_original>
